<compile_context>
chip_gen: v6e
topology: v6e:2x2x1
jax: 0.10.0
libtpu: 0.0.40
codegen_flags: <defaults>
</compile_context>

<pallas_src>
import functools

import jax
import jax.numpy as jnp
from jax.experimental import pallas as pl
from jax.experimental.pallas import tpu as pltpu


def _round_up(v, m):
    return ((v + m - 1) // m) * m


def _routing_kernel(max_visits,
                    x_ref,       # VMEM (TB, D_in)    input dtype (cast in-kernel)
                    w1_ref,      # VMEM (D_in, H)     compute dtype (grid-resident)
                    b1_ref,      # VMEM (1, H)        f32           (grid-resident)
                    w2_ref,      # VMEM (H, E_out)    compute dtype (grid-resident)
                    b2_ref,      # VMEM (1, E_out)    f32           (grid-resident)
                    counts_ref,  # VMEM (TB, E_out)   int32; terminate col = INT32_MIN
                    out_ref):    # VMEM (TB, E_out)   f32
    # Cast x to the MXU compute dtype here (keeps the HBM x-stream at its raw width).
    x = x_ref[...].astype(w1_ref.dtype)

    # fc1 + ReLU  (MXU matmul, f32 accumulate; epilogue in f32 — v5e-safe)
    h = jnp.dot(x, w1_ref[...], preferred_element_type=jnp.float32) + b1_ref[...]
    h = jnp.maximum(h, 0.0)

    # fc2
    logits = jnp.dot(h.astype(w2_ref.dtype), w2_ref[...],
                     preferred_element_type=jnp.float32) + b2_ref[...]

    # Visit-count mask.  Terminate column / padded rows carry INT32_MIN counts, so a
    # single compare suffices (they can never reach a non-negative cap).
    blocked = counts_ref[...] >= max_visits
    out_ref[...] = jnp.where(blocked, -jnp.inf, logits)


def routing_controller_forward(x, visit_counts, w1, b1, w2, b2, *,
                               max_visits_per_expert, num_experts,
                               compute_dtype=jnp.bfloat16, tb_max=1024):
    """x: (B, D_in) or (D_in,); visit_counts: (B, E) or (E,); returns logits (B, E+1) f32."""
    squeeze = (x.ndim == 1)
    if squeeze:
        x = x[None, :]
        visit_counts = visit_counts[None, :]

    B, D_in = x.shape
    H = w1.shape[1]
    E_out = num_experts + 1
    cdt = compute_dtype

    # ---- Batch tile selection ----------------------------------------------------
    # Big tiles amortize the ~0.35 us per-grid-step overhead; for large B keep the
    # grid at >= 2 balanced steps so the "parallel" axis uses both v7x TensorCores.
    tb_max = max(8, (tb_max // 8) * 8)
    B8 = _round_up(B, 8)
    if B8 <= 8:
        TB = B8
    elif B8 <= 2 * tb_max:
        TB = _round_up((B8 + 1) // 2, 8)        # exactly 2 (balanced) grid steps
    else:
        TB = tb_max
    B_pad = _round_up(B, TB)
    grid = (B_pad // TB,)

    # ---- Wrapper-side prep (only batch padding; no lane padding) ------------------
    # TODO(synk): for a production router, pre-cast the weights to bf16 once outside
    # this call instead of per invocation (they are ~1.5 KiB here, so it is noise).
    x_p = jnp.zeros((B_pad, D_in), x.dtype).at[:B, :].set(x)
    w1_c = w1.astype(cdt)
    w2_c = w2.astype(cdt)
    b1_2d = b1.astype(jnp.float32).reshape(1, H)
    b2_2d = b2.astype(jnp.float32).reshape(1, E_out)

    # Sentinel counts: terminate column + batch-padding rows can never be blocked.
    sentinel = jnp.iinfo(jnp.int32).min
    counts_p = jnp.full((B_pad, E_out), sentinel, dtype=jnp.int32)
    counts_p = counts_p.at[:B, :num_experts].set(visit_counts.astype(jnp.int32))

    kernel = functools.partial(_routing_kernel, int(max_visits_per_expert))

    # ---- Honest VMEM budget --------------------------------------------------------
    w_isz = jnp.dtype(cdt).itemsize
    x_isz = jnp.dtype(x_p.dtype).itemsize
    resident = (D_in * H + H * E_out) * w_isz + (H + E_out) * 4
    per_step = TB * D_in * x_isz + 2 * TB * E_out * 4      # x + counts + out tiles
    vmem_needed = 2 * (resident + per_step) + (1 << 20)

    compiler_kwargs = dict(dimension_semantics=("parallel",))
    if vmem_needed > (16 << 20):
        # Cap below v7x's 64 MiB physical VMEM; plenty for v5e/v6e as well.
        compiler_kwargs["vmem_limit_bytes"] = int(min(vmem_needed, 56 << 20))

    out = pl.pallas_call(
        kernel,
        out_shape=jax.ShapeDtypeStruct((B_pad, E_out), jnp.float32),
        grid=grid,
        in_specs=[
            pl.BlockSpec((TB, D_in), lambda i: (i, 0)),    # x       (tiled over batch)
            pl.BlockSpec((D_in, H), lambda i: (0, 0)),     # w1      (VMEM-resident)
            pl.BlockSpec((1, H), lambda i: (0, 0)),        # b1      (VMEM-resident)
            pl.BlockSpec((H, E_out), lambda i: (0, 0)),    # w2      (VMEM-resident)
            pl.BlockSpec((1, E_out), lambda i: (0, 0)),    # b2      (VMEM-resident)
            pl.BlockSpec((TB, E_out), lambda i: (i, 0)),   # counts  (tiled over batch)
        ],
        out_specs=pl.BlockSpec((TB, E_out), lambda i: (i, 0)),
        compiler_params=pltpu.CompilerParams(**compiler_kwargs),
    )(x_p, w1_c, b1_2d, w2_c, b2_2d, counts_p)

    logits = out[:B, :]
    if squeeze:
        logits = logits[0]
    return logits


def init_params(key, input_dim, hidden_dim, num_experts):
    """Deterministic nn.Linear-style (uniform) init. Weights stored (in, out)."""
    k1, k2, k3, k4 = jax.random.split(key, 4)
    bound1 = 1.0 / jnp.sqrt(input_dim)
    bound2 = 1.0 / jnp.sqrt(hidden_dim)
    w1 = jax.random.uniform(k1, (input_dim, hidden_dim), jnp.float32, -bound1, bound1)
    b1 = jax.random.uniform(k2, (hidden_dim,), jnp.float32, -bound1, bound1)
    w2 = jax.random.uniform(k3, (hidden_dim, num_experts + 1), jnp.float32, -bound2, bound2)
    b2 = jax.random.uniform(k4, (num_experts + 1,), jnp.float32, -bound2, bound2)
    return w1, b1, w2, b2


if __name__ == "__main__":
    batch = 2
    input_dim = 16
    hidden_dim = 32
    num_experts = 4
    max_visits_per_expert = 2

    key = jax.random.PRNGKey(0)
    kp, kx, kc = jax.random.split(key, 3)

    w1, b1, w2, b2 = init_params(kp, input_dim, hidden_dim, num_experts)
    x = jax.random.normal(kx, (batch, input_dim), dtype=jnp.float32)
    visit_counts = jax.random.randint(kc, (batch, num_experts), 0, 4, dtype=jnp.int32)

    fwd = jax.jit(routing_controller_forward,
                  static_argnames=("max_visits_per_expert", "num_experts",
                                   "compute_dtype", "tb_max"))

    logits = fwd(x, visit_counts, w1, b1, w2, b2,
                 max_visits_per_expert=max_visits_per_expert,
                 num_experts=num_experts,
                 compute_dtype=jnp.bfloat16)
    logits = jax.block_until_ready(logits)

    # Pure-JAX f32 reference (kernel uses bf16 matmuls -> loose tolerance).
    h_ref = jnp.maximum(x @ w1 + b1, 0.0)
    logits_ref = h_ref @ w2 + b2
    blocked = visit_counts >= max_visits_per_expert
    blocked_full = jnp.concatenate(
        [blocked, jnp.zeros((batch, 1), dtype=bool)], axis=1)
    logits_ref = jnp.where(blocked_full, -jnp.inf, logits_ref)

    finite = jnp.isfinite(logits_ref)
    assert logits.shape == logits_ref.shape
    assert bool(jnp.all(jnp.isfinite(logits) == finite))
    assert bool(jnp.allclose(jnp.where(finite, logits, 0.0),
                             jnp.where(finite, logits_ref, 0.0),
                             atol=5e-2, rtol=5e-2))

    print("KERNEL_OK")
</pallas_src>

<mosaic_0001>
module attributes {stable_mosaic.version = 11 : i64} {
  func.func @_routing_kernel(%arg0: i32, %arg1: memref<8x16xf32, #tpu.memory_space<vmem>>, %arg2: memref<16x32xbf16, #tpu.memory_space<vmem>>, %arg3: memref<1x32xf32, #tpu.memory_space<vmem>>, %arg4: memref<32x5xbf16, #tpu.memory_space<vmem>>, %arg5: memref<1x5xf32, #tpu.memory_space<vmem>>, %arg6: memref<8x5xi32, #tpu.memory_space<vmem>>, %arg7: memref<8x5xf32, #tpu.memory_space<vmem>>) attributes {dimension_semantics = [#tpu.dimension_semantics<parallel>], iteration_bounds = array<i64: 1>, scalar_prefetch = 0 : i64, scratch_operands = 0 : i64, tpu.core_type = #tpu.core_type<tc>, window_params = [{transform_indices = @transform_0, window_bounds = array<i64: 8, 16>}, {pipeline_mode = #tpu.pipeline_mode<synchronous>, transform_indices = @transform_1, window_bounds = array<i64: 16, 32>}, {pipeline_mode = #tpu.pipeline_mode<synchronous>, transform_indices = @transform_2, window_bounds = array<i64: 1, 32>}, {pipeline_mode = #tpu.pipeline_mode<synchronous>, transform_indices = @transform_3, window_bounds = array<i64: 32, 5>}, {pipeline_mode = #tpu.pipeline_mode<synchronous>, transform_indices = @transform_4, window_bounds = array<i64: 1, 5>}, {transform_indices = @transform_5, window_bounds = array<i64: 8, 5>}, {transform_indices = @transform_6, window_bounds = array<i64: 8, 5>}]} {
    %c0 = arith.constant 0 : index
    %c0_0 = arith.constant 0 : index
    %0 = vector.load %arg1[%c0, %c0_0] : memref<8x16xf32, #tpu.memory_space<vmem>>, vector<8x16xf32>
    %1 = arith.truncf %0 : vector<8x16xf32> to vector<8x16xbf16>
    %c0_1 = arith.constant 0 : index
    %c0_2 = arith.constant 0 : index
    %2 = vector.load %arg2[%c0_1, %c0_2] : memref<16x32xbf16, #tpu.memory_space<vmem>>, vector<16x32xbf16>
    %cst = arith.constant dense<0.000000e+00> : vector<8x32xf32>
    %3 = tpu.matmul %1, %2, %cst {dimension_numbers = #tpu.dot_dimension_numbers<[1], [0], [0], [1], [0, 0, 1, 1], [], []>} : vector<8x16xbf16>, vector<16x32xbf16>, vector<8x32xf32> -> vector<8x32xf32>
    %c0_3 = arith.constant 0 : index
    %c0_4 = arith.constant 0 : index
    %4 = vector.load %arg3[%c0_3, %c0_4] : memref<1x32xf32, #tpu.memory_space<vmem>>, vector<1x32xf32>
    %5 = vector.broadcast %4 : vector<1x32xf32> to vector<8x32xf32>
    %6 = arith.addf %3, %5 : vector<8x32xf32>
    %cst_5 = arith.constant 0.000000e+00 : f32
    %7 = vector.broadcast %cst_5 : f32 to vector<8x32xf32>
    %8 = arith.maximumf %6, %7 : vector<8x32xf32>
    %9 = arith.truncf %8 : vector<8x32xf32> to vector<8x32xbf16>
    %c0_6 = arith.constant 0 : index
    %c0_7 = arith.constant 0 : index
    %10 = vector.load %arg4[%c0_6, %c0_7] : memref<32x5xbf16, #tpu.memory_space<vmem>>, vector<32x5xbf16>
    %cst_8 = arith.constant dense<0.000000e+00> : vector<8x5xf32>
    %11 = tpu.matmul %9, %10, %cst_8 {dimension_numbers = #tpu.dot_dimension_numbers<[1], [0], [0], [1], [0, 0, 1, 1], [], []>} : vector<8x32xbf16>, vector<32x5xbf16>, vector<8x5xf32> -> vector<8x5xf32>
    %c0_9 = arith.constant 0 : index
    %c0_10 = arith.constant 0 : index
    %12 = vector.load %arg5[%c0_9, %c0_10] : memref<1x5xf32, #tpu.memory_space<vmem>>, vector<1x5xf32>
    %13 = vector.broadcast %12 : vector<1x5xf32> to vector<8x5xf32>
    %14 = arith.addf %11, %13 : vector<8x5xf32>
    %c0_11 = arith.constant 0 : index
    %c0_12 = arith.constant 0 : index
    %15 = vector.load %arg6[%c0_11, %c0_12] : memref<8x5xi32, #tpu.memory_space<vmem>>, vector<8x5xi32>
    %c2_i32 = arith.constant 2 : i32
    %16 = vector.broadcast %c2_i32 : i32 to vector<8x5xi32>
    %17 = arith.cmpi sge, %15, %16 : vector<8x5xi32>
    %cst_13 = arith.constant 0xFF800000 : f32
    %18 = vector.broadcast %cst_13 : f32 to vector<8x5xf32>
    %19 = arith.select %17, %18, %14 : vector<8x5xi1>, vector<8x5xf32>
    %c0_14 = arith.constant 0 : index
    %c0_15 = arith.constant 0 : index
    %20 = vector.load %arg7[%c0_14, %c0_15] : memref<8x5xf32, #tpu.memory_space<vmem>>, vector<8x5xf32>
    tpu.vector_store %arg7[%c0_14, %c0_15], %19 {strides = array<i32>} : memref<8x5xf32, #tpu.memory_space<vmem>>, vector<8x5xf32>,
    return
  }
  func.func @transform_0(%arg0: i32) -> (i32, i32) {
    %c0_i32 = arith.constant 0 : i32
    %c0_i32_0 = arith.constant 0 : i32
    return %arg0, %c0_i32 : i32, i32
  }
  func.func @transform_1(%arg0: i32) -> (i32, i32) {
    %c0_i32 = arith.constant 0 : i32
    %c0_i32_0 = arith.constant 0 : i32
    %c0_i32_1 = arith.constant 0 : i32
    return %c0_i32, %c0_i32_0 : i32, i32
  }
  func.func @transform_2(%arg0: i32) -> (i32, i32) {
    %c0_i32 = arith.constant 0 : i32
    %c0_i32_0 = arith.constant 0 : i32
    %c0_i32_1 = arith.constant 0 : i32
    return %c0_i32, %c0_i32_0 : i32, i32
  }
  func.func @transform_3(%arg0: i32) -> (i32, i32) {
    %c0_i32 = arith.constant 0 : i32
    %c0_i32_0 = arith.constant 0 : i32
    %c0_i32_1 = arith.constant 0 : i32
    return %c0_i32, %c0_i32_0 : i32, i32
  }
  func.func @transform_4(%arg0: i32) -> (i32, i32) {
    %c0_i32 = arith.constant 0 : i32
    %c0_i32_0 = arith.constant 0 : i32
    %c0_i32_1 = arith.constant 0 : i32
    return %c0_i32, %c0_i32_0 : i32, i32
  }
  func.func @transform_5(%arg0: i32) -> (i32, i32) {
    %c0_i32 = arith.constant 0 : i32
    %c0_i32_0 = arith.constant 0 : i32
    return %arg0, %c0_i32 : i32, i32
  }
  func.func @transform_6(%arg0: i32) -> (i32, i32) {
    %c0_i32 = arith.constant 0 : i32
    %c0_i32_0 = arith.constant 0 : i32
    return %arg0, %c0_i32 : i32, i32
  }
}

</mosaic_0001>

<llo_original>
// kernel: routing_controller_forward.1
$region0: #{routing_controller_forward.1}
  #allocation0 [shape = 'u32[]', space=smem, size = 0x4, offset = 0x4, fixed_abs, tag = 'smem constant byte address 0x4 - core index']
  #allocation1 [shape = 'u32[144,128]{1,0:T(1,128)}', space=vmem, size = 0x12000, scoped, tag = 'internal scratch']
  %s0 = inlined_call_operand.vmem [shape: f32[8,16], index: 0, kind: input, shape index: {}]
  %s1 = inlined_call_operand.vmem [shape: bf16[16,32], index: 1, kind: input, shape index: {}]
  %s2 = inlined_call_operand.vmem [shape: f32[1,32], index: 2, kind: input, shape index: {}]
  %s3 = inlined_call_operand.vmem [shape: bf16[32,5], index: 3, kind: input, shape index: {}]
  %s4 = inlined_call_operand.vmem [shape: f32[1,5], index: 4, kind: input, shape index: {}]
  %s5 = inlined_call_operand.vmem [shape: s32[8,5], index: 5, kind: input, shape index: {}]
  %s6 = inlined_call_operand.vmem [shape: f32[8,5], index: 6, kind: output, shape index: {}]
  %s7 = sld [smem:[#allocation0]]
  $region34: #{routing_controller_forward.1} parent=0
    _
  %s9 = ssub.s32 1, %s7
  %s10 = scalar_select 0, %s9, %s7
  // Predicated region
  $region2: #{routing_controller_forward.1} parent=0 // pred_check
    _
  $region3: #{routing_controller_forward.1} parent=0 // pred_check_branch
    %12 = sbr.rel (0) target = $region5
  $region4: #{routing_controller_forward.1} parent=0 // pred_region
    _
  $region5: #{routing_controller_forward.1} parent=0 // pred_fallthru
    _
  // Predicated region
  $region6: #{routing_controller_forward.1} parent=0 // pred_check
    _
  $region7: #{routing_controller_forward.1} parent=0 // pred_check_branch
    %14 = sbr.rel (0) target = $region9
  $region8: #{routing_controller_forward.1} parent=0 // pred_region
    _
  $region9: #{routing_controller_forward.1} parent=0 // pred_fallthru
    _
  // Predicated region
  $region10: #{routing_controller_forward.1} parent=0 // pred_check
    _
  $region11: #{routing_controller_forward.1} parent=0 // pred_check_branch
    %16 = sbr.rel (0) target = $region13
  $region12: #{routing_controller_forward.1} parent=0 // pred_region
    _
  $region13: #{routing_controller_forward.1} parent=0 // pred_fallthru
    _
  // Predicated region
  $region14: #{routing_controller_forward.1} parent=0 // pred_check
    _
  $region15: #{routing_controller_forward.1} parent=0 // pred_check_branch
    %18 = sbr.rel (0) target = $region17
  $region16: #{routing_controller_forward.1} parent=0 // pred_region
    _
  $region17: #{routing_controller_forward.1} parent=0 // pred_fallthru
    _
  // Predicated region
  $region18: #{routing_controller_forward.1} parent=0 // pred_check
    _
  $region19: #{routing_controller_forward.1} parent=0 // pred_check_branch
    %20 = sbr.rel (0) target = $region21
  $region20: #{routing_controller_forward.1} parent=0 // pred_region
    _
  $region21: #{routing_controller_forward.1} parent=0 // pred_fallthru
    _
  // Predicated region
  $region22: #{routing_controller_forward.1} parent=0 // pred_check
    _
  $region23: #{routing_controller_forward.1} parent=0 // pred_check_branch
    %22 = sbr.rel (0) target = $region25
  $region24: #{routing_controller_forward.1} parent=0 // pred_region
    _
  $region25: #{routing_controller_forward.1} parent=0 // pred_fallthru
    _
  %v24 = vld [vmem:[%s0] sm:$0xff]
  %v25 = vpack.c.bf16 %v24, %v24
  %v26 = vld [vmem:[%s1] sm:$0xf]
  %v27 = vld [vmem:[%s1 + $0x4] sm:$0xf]
  %v28 = vld [vmem:[%s2] sm:$0x1]
  %v30 = vlaneseq
  %v31 = vshrl.u32 %v30, 7
  %v32 = vsub.s32 0, %v31
  %v33 = vrot.slane %v28, %v32
  %v37 = vunpack.c.l.b16 %v26
  %v38 = vunpack.c.l.b16 %v27
  %v39 = vpack.c.b16 %v38, %v37
  %vm41 = vcmask 130048
  %v43 = vsel %vm41, %v25, 0
  %45 = vmatprep.subr.bf16.mxu0 0
  %46 = vmatpush1.bf16.msra.mxu0 0
  %47 = vmatprep.subr.bf16.mxu0 0
  %48 = vmatpush1.bf16.msra.mxu0 0
  %49 = vmatprep.subr.bf16.mxu0 0
  %50 = vmatpush1.bf16.msra.mxu0 0
  %51 = vmatprep.subr.bf16.mxu0 0
  %52 = vmatpush1.bf16.msra.mxu0 0
  %53 = vmatprep.subr.bf16.mxu0 0
  %54 = vmatpush1.bf16.msra.mxu0 0
  %55 = vmatprep.subr.bf16.mxu0 0
  %56 = vmatpush1.bf16.msra.mxu0 0
  %57 = vmatprep.subr.bf16.mxu0 0
  %58 = vmatpush1.bf16.msra.mxu0 0
  %59 = vmatprep.subr.bf16.mxu0 0
  %60 = vmatpush1.bf16.msra.mxu0 %v39
  %61 = vmatprep.subr.bf16.mxu0 0
  %62 = vmatpush2.bf16.msra.mxu0 0
  %63 = vmatprep.subr.bf16.mxu0 0
  %64 = vmatpush2.bf16.msra.mxu0 0
  %65 = vmatprep.subr.bf16.mxu0 0
  %66 = vmatpush2.bf16.msra.mxu0 0
  %67 = vmatprep.subr.bf16.mxu0 0
  %68 = vmatpush2.bf16.msra.mxu0 0
  %69 = vmatprep.subr.bf16.mxu0 0
  %70 = vmatpush2.bf16.msra.mxu0 0
  %71 = vmatprep.subr.bf16.mxu0 0
  %72 = vmatpush2.bf16.msra.mxu0 0
  %73 = vmatprep.subr.bf16.mxu0 0
  %74 = vmatpush2.bf16.msra.mxu0 0
  %75 = vmatprep.subr.bf16.mxu0 0
  %76 = vmatpush2.bf16.msra.mxu0 0
  %77 = vmatprep.mubr.bf16.mxu0 0
  %78 = vmatmul.mubr.bf16.gmra.mxu0 %v43
  %v79 = vpop.f32.mrf.mxu0
  %v80 = vadd.f32 %v33, %v79
  %v81 = vpop.f32.mrf.mxu0
  %v82 = vpop.f32.mrf.mxu0
  %v83 = vpop.f32.mrf.mxu0
  %84 = vdwg.mxu0
  %v85 = vmax.f32 %v80, 0.0
  %v86 = vpack.c.bf16 %v85, %v85
  %v87 = vld [vmem:[%s3] sm:$0xf]
  %v88 = vld [vmem:[%s3 + $0x4] sm:$0xf]
  %v89 = vld [vmem:[%s3 + $0x8] sm:$0xf]
  %v90 = vld [vmem:[%s3 + $0xc] sm:$0xf]
  %v91 = vld [vmem:[%s4] sm:$0x1]
  %v93 = vlaneseq
  %v94 = vshrl.u32 %v93, 7
  %v95 = vsub.s32 0, %v94
  %v96 = vrot.slane %v91, %v95
  %v102 = vunpack.c.l.b16 %v87
  %v103 = vunpack.c.l.b16 %v88
  %v104 = vunpack.c.l.b16 %v89
  %v105 = vunpack.c.l.b16 %v90
  %v106 = vpack.c.b16 %v103, %v102
  %v107 = vpack.c.b16 %v105, %v104
  %vm110 = vcmask 261120
  %v112 = vsel %vm110, %v86, 0
  %114 = vmatprep.subr.bf16.mxu0 0
  %115 = vmatpush1.bf16.msra.mxu0 0
  %116 = vmatprep.subr.bf16.mxu0 0
  %117 = vmatpush1.bf16.msra.mxu0 0
  %118 = vmatprep.subr.bf16.mxu0 0
  %119 = vmatpush1.bf16.msra.mxu0 0
  %120 = vmatprep.subr.bf16.mxu0 0
  %121 = vmatpush1.bf16.msra.mxu0 0
  %122 = vmatprep.subr.bf16.mxu0 0
  %123 = vmatpush1.bf16.msra.mxu0 0
  %124 = vmatprep.subr.bf16.mxu0 0
  %125 = vmatpush1.bf16.msra.mxu0 0
  %126 = vmatprep.subr.bf16.mxu0 0
  %127 = vmatpush1.bf16.msra.mxu0 %v107
  %128 = vmatprep.subr.bf16.mxu0 0
  %129 = vmatpush1.bf16.msra.mxu0 %v106
  %130 = vmatprep.subr.bf16.mxu0 0
  %131 = vmatpush2.bf16.msra.mxu0 0
  %132 = vmatprep.subr.bf16.mxu0 0
  %133 = vmatpush2.bf16.msra.mxu0 0
  %134 = vmatprep.subr.bf16.mxu0 0
  %135 = vmatpush2.bf16.msra.mxu0 0
  %136 = vmatprep.subr.bf16.mxu0 0
  %137 = vmatpush2.bf16.msra.mxu0 0
  %138 = vmatprep.subr.bf16.mxu0 0
  %139 = vmatpush2.bf16.msra.mxu0 0
  %140 = vmatprep.subr.bf16.mxu0 0
  %141 = vmatpush2.bf16.msra.mxu0 0
  %142 = vmatprep.subr.bf16.mxu0 0
  %143 = vmatpush2.bf16.msra.mxu0 0
  %144 = vmatprep.subr.bf16.mxu0 0
  %145 = vmatpush2.bf16.msra.mxu0 0
  %146 = vmatprep.mubr.bf16.mxu0 0
  %147 = vmatmul.mubr.bf16.gmra.mxu0 %v112
  %v148 = vpop.f32.mrf.mxu0
  %v149 = vadd.f32 %v96, %v148
  %v150 = vpop.f32.mrf.mxu0
  %v151 = vpop.f32.mrf.mxu0
  %v152 = vpop.f32.mrf.mxu0
  %153 = vdwg.mxu0
  %v154 = vld [vmem:[%s5] sm:$0xff]
  %vm155 = vcmp.ge.s32.totalorder %v154, 2
  %v156 = vsel %vm155, -inf, %v149
  %vm157 = vcmask 39936
  %158 = vst.msk [vmem:[%s6] sm:$0xff] %vm157, %v156
  // Predicated region
  $region26: #{routing_controller_forward.1} parent=0 // pred_check
    _
  $region27: #{routing_controller_forward.1} parent=0 // pred_check_branch
    %160 = sbr.rel (0) target = $region29
  $region28: #{routing_controller_forward.1} parent=0 // pred_region
    _
  $region29: #{routing_controller_forward.1} parent=0 // pred_fallthru
    _
  // Predicated region
  $region30: #{routing_controller_forward.1} parent=0 // pred_check
    _
  $region31: #{routing_controller_forward.1} parent=0 // pred_check_branch
    %162 = sbr.rel (0) target = $region33
  $region32: #{routing_controller_forward.1} parent=0 // pred_region
    _
  $region33: #{routing_controller_forward.1} parent=0 // pred_fallthru
    _

</llo_original>
